<compile_context>
chip_gen: v7x
topology: tpu7x:2x2x1
jax: 0.10.0
libtpu: 0.0.40
codegen_flags: <defaults>
</compile_context>

<pallas_src>
import functools
import math

import jax
import jax.numpy as jnp
from jax import lax
from jax.experimental import pallas as pl
from jax.experimental.pallas import tpu as pltpu

_LANES = 128


def _pick_chunk_rows(tile_rows):
    for c in (512, 256, 128, 64, 32, 16, 8):
        if tile_rows % c == 0:
            return c
    return tile_rows


def _select_tile_params(tile_bytes_override=None):
    """Returns (per-input-buffer tile bytes, vmem_limit_bytes), generation-gated."""
    vmem_phys = 128 << 20
    try:
        info = pltpu.get_tpu_info()
        vmem_phys = int(getattr(info, "vmem_capacity_bytes", vmem_phys))
    except Exception:
        pass
    if vmem_phys <= (96 << 20):
        # v7x-class core: 64 MiB VMEM, ~3.2 TB/s HBM -> 8 MiB tiles to amortize
        # the per-grid-step overhead; 2 inputs x 2 buffers x 8 MiB = 32 MiB.
        tile_bytes, vmem_limit = 8 << 20, 48 << 20
    else:
        # v5e / v6e: 128 MiB physical VMEM; 4 MiB tiles already keep step
        # overhead <10% at their HBM bandwidth.
        tile_bytes, vmem_limit = 4 << 20, 40 << 20
    if tile_bytes_override is not None:
        tile_bytes = int(tile_bytes_override)
    return tile_bytes, vmem_limit


def _fel_kernel(o_ref, oh_ref, mu_ref, sigma_ref, reg_ref, rec_ref, acc_ref, *,
                chunk_rows, n_chunks, tile_rows, rows_total, needs_mask,
                inv_two_var, inv_batch, prior_mu, inv_prior_sigma):
    step = pl.program_id(0)

    @pl.when(step == 0)
    def _():
        acc_ref[...] = jnp.zeros_like(acc_ref)
        # Closed-form KL(N(mu, sigma) || N(prior_mu, prior_sigma)).sum(axis=1).mean()
        mu = mu_ref[...].astype(jnp.float32)
        sig = sigma_ref[...].astype(jnp.float32)
        var_ratio = (sig * inv_prior_sigma) ** 2
        t1 = ((mu - prior_mu) * inv_prior_sigma) ** 2
        kl = 0.5 * (var_ratio + t1 - 1.0 - jnp.log(var_ratio))
        reg_ref[0, 0] = jnp.sum(kl) * jnp.float32(inv_batch)

    def accumulate(c):
        start = c * chunk_rows
        if not isinstance(start, int):
            start = pl.multiple_of(start, 8)
        oc = o_ref[pl.ds(start, chunk_rows), :].astype(jnp.float32)
        hc = oh_ref[pl.ds(start, chunk_rows), :].astype(jnp.float32)
        d = oc - hc
        if needs_mask:
            # Rows past rows_total in the final (partial) block are UNDEFINED
            # (no padding was materialized in HBM): zero them before squaring.
            valid = rows_total - step * tile_rows - c * chunk_rows
            row_id = lax.broadcasted_iota(jnp.int32, (chunk_rows, _LANES), 0)
            d = jnp.where(row_id < valid, d, 0.0)
        acc_ref[...] += d * d

    if n_chunks == 1:
        accumulate(0)
    else:
        def body(c, carry):
            accumulate(c)
            return carry
        lax.fori_loop(0, n_chunks, body, jnp.int32(0), unroll=min(4, n_chunks))

    @pl.when(step == pl.num_programs(0) - 1)
    def _():
        rec_ref[0, 0] = jnp.sum(acc_ref[...]) * jnp.float32(inv_two_var)


def free_energy_loss(o, o_hat, mu, sigma, var=1.0, prior_args=(0.0, 1.0), *,
                     tile_bytes=None):
    """Returns (reg, rec) matching FreeEnergyLoss.forward(o, o_hat, Normal(mu, sigma), var)."""
    assert o.shape == o_hat.shape and o.dtype == o_hat.dtype
    n = math.prod(int(s) for s in o.shape)
    assert n > 0

    o_flat = o.reshape(-1)
    oh_flat = o_hat.reshape(-1)

    # Only pad to a 128-lane multiple when strictly required for the (rows, 128)
    # view (rare for image tensors, <128 elements).  No tile-multiple padding.
    lane_pad = (-n) % _LANES
    if lane_pad:
        o_flat = jnp.pad(o_flat, (0, lane_pad))
        oh_flat = jnp.pad(oh_flat, (0, lane_pad))
    rows = (n + lane_pad) // _LANES

    itemsize = jnp.dtype(o.dtype).itemsize
    tb, vmem_limit = _select_tile_params(tile_bytes)
    target_rows = max(512, (tb // (_LANES * itemsize) // 512) * 512)

    if rows > target_rows:
        tile_rows = target_rows     # multiple of 512; final block may be ragged
    else:
        tile_rows = rows            # single full-extent block (no OOB rows)
    chunk_rows = _pick_chunk_rows(tile_rows)
    n_chunks = tile_rows // chunk_rows
    needs_mask = (rows % tile_rows) != 0
    grid = (pl.cdiv(rows, tile_rows),)

    o2 = o_flat.reshape(rows, _LANES)
    oh2 = oh_flat.reshape(rows, _LANES)

    bsz, zdim = mu.shape

    kernel = functools.partial(
        _fel_kernel,
        chunk_rows=chunk_rows, n_chunks=n_chunks, tile_rows=tile_rows,
        rows_total=rows, needs_mask=needs_mask,
        inv_two_var=1.0 / (2.0 * float(var)),
        inv_batch=1.0 / float(bsz),
        prior_mu=float(prior_args[0]),
        inv_prior_sigma=1.0 / float(prior_args[1]),
    )

    reg, rec = pl.pallas_call(
        kernel,
        out_shape=(
            jax.ShapeDtypeStruct((1, 1), jnp.float32),
            jax.ShapeDtypeStruct((1, 1), jnp.float32),
        ),
        grid_spec=pltpu.PrefetchScalarGridSpec(
            num_scalar_prefetch=0,
            grid=grid,
            in_specs=[
                pl.BlockSpec((tile_rows, _LANES), lambda i: (i, 0)),
                pl.BlockSpec((tile_rows, _LANES), lambda i: (i, 0)),
                # mu / sigma are tiny: full-extent blocks, resident across the grid.
                pl.BlockSpec((bsz, zdim), lambda i: (0, 0)),
                pl.BlockSpec((bsz, zdim), lambda i: (0, 0)),
            ],
            out_specs=(
                pl.BlockSpec((1, 1), lambda i: (0, 0),
                             memory_space=pltpu.MemorySpace.SMEM),
                pl.BlockSpec((1, 1), lambda i: (0, 0),
                             memory_space=pltpu.MemorySpace.SMEM),
            ),
            scratch_shapes=[pltpu.VMEM((chunk_rows, _LANES), jnp.float32)],
        ),
        compiler_params=pltpu.CompilerParams(
            dimension_semantics=("arbitrary",),
            vmem_limit_bytes=vmem_limit,
        ),
    )(o2, oh2, mu, sigma)

    return reg[0, 0], rec[0, 0]


def _reference(o, o_hat, mu, sigma, var=1.0):
    of = o.astype(jnp.float32)
    ohf = o_hat.astype(jnp.float32)
    rec = jnp.sum((ohf - of) ** 2) / (2.0 * var)
    muf = mu.astype(jnp.float32)
    sigf = sigma.astype(jnp.float32)
    kl = 0.5 * (sigf**2 + muf**2 - 1.0 - jnp.log(sigf**2))
    reg = jnp.mean(jnp.sum(kl, axis=1))
    return reg, rec


if __name__ == "__main__":
    key = jax.random.PRNGKey(0)
    keys = jax.random.split(key, 12)
    Z = 32

    # Case 1: small f32 NCHW input -- single full-extent block, no pad, no mask.
    B = 2
    o = jax.random.normal(keys[0], (B, 4, 16, 16), dtype=jnp.float32)
    o_hat = jax.random.normal(keys[1], (B, 4, 16, 16), dtype=jnp.float32)
    mu = jax.random.normal(keys[2], (B, Z), dtype=jnp.float32)
    sigma = jax.nn.softplus(jax.random.normal(keys[3], (B, Z), dtype=jnp.float32)) + 1e-3
    reg, rec = free_energy_loss(o, o_hat, mu, sigma, var=1.0)
    jax.block_until_ready((reg, rec))
    reg_r, rec_r = _reference(o, o_hat, mu, sigma, var=1.0)
    assert jnp.allclose(rec, rec_r, rtol=1e-5, atol=1e-5), (rec, rec_r)
    assert jnp.allclose(reg, reg_r, rtol=1e-5, atol=1e-5), (reg, reg_r)

    # Case 2: bf16 input whose element count is not a multiple of 128 --
    # exercises the tiny lane pad, native-dtype streaming, and var != 1.
    B2 = 2
    o2 = jax.random.normal(keys[4], (B2, 3, 97, 111), dtype=jnp.float32).astype(jnp.bfloat16)
    oh2 = jax.random.normal(keys[5], (B2, 3, 97, 111), dtype=jnp.float32).astype(jnp.bfloat16)
    mu2 = jax.random.normal(keys[6], (B2, Z), dtype=jnp.float32)
    sigma2 = jax.nn.softplus(jax.random.normal(keys[7], (B2, Z), dtype=jnp.float32)) + 1e-3
    reg2, rec2 = free_energy_loss(o2, oh2, mu2, sigma2, var=0.65)
    jax.block_until_ready((reg2, rec2))
    reg2_r, rec2_r = _reference(o2, oh2, mu2, sigma2, var=0.65)
    assert jnp.allclose(rec2, rec2_r, rtol=1e-4, atol=1e-4), (rec2, rec2_r)
    assert jnp.allclose(reg2, reg2_r, rtol=1e-4, atol=1e-4), (reg2, reg2_r)

    # Case 3: force a small (512 KiB) tile so the grid has several steps with a
    # ragged final block -- exercises multi-step accumulation, the multi-chunk
    # fori_loop, and the in-kernel tail mask (no HBM padding copies).
    B3 = 4
    o3 = jax.random.normal(keys[8], (B3, 4, 64, 130), dtype=jnp.float32)
    oh3 = jax.random.normal(keys[9], (B3, 4, 64, 130), dtype=jnp.float32)
    mu3 = jax.random.normal(keys[10], (B3, Z), dtype=jnp.float32)
    sigma3 = jax.nn.softplus(jax.random.normal(keys[11], (B3, Z), dtype=jnp.float32)) + 1e-3
    reg3, rec3 = free_energy_loss(o3, oh3, mu3, sigma3, var=2.0, tile_bytes=512 << 10)
    jax.block_until_ready((reg3, rec3))
    reg3_r, rec3_r = _reference(o3, oh3, mu3, sigma3, var=2.0)
    assert jnp.allclose(rec3, rec3_r, rtol=1e-4, atol=1e-4), (rec3, rec3_r)
    assert jnp.allclose(reg3, reg3_r, rtol=1e-4, atol=1e-4), (reg3, reg3_r)

    print("KERNEL_OK")
</pallas_src>

<mosaic_0001>
module attributes {stable_mosaic.version = 11 : i64} {
  func.func @_fel_kernel(%arg0: i32, %arg1: memref<16x128xf32, #tpu.memory_space<vmem>>, %arg2: memref<16x128xf32, #tpu.memory_space<vmem>>, %arg3: memref<2x32xf32, #tpu.memory_space<vmem>>, %arg4: memref<2x32xf32, #tpu.memory_space<vmem>>, %arg5: memref<1x1xf32, #tpu.memory_space<smem>>, %arg6: memref<1x1xf32, #tpu.memory_space<smem>>, %arg7: memref<16x128xf32, #tpu.memory_space<vmem>>) attributes {dimension_semantics = [#tpu.dimension_semantics<arbitrary>], iteration_bounds = array<i64: 1>, scalar_prefetch = 0 : i64, scratch_operands = 1 : i64, tpu.core_type = #tpu.core_type<tc>, window_params = [{transform_indices = @transform_0, window_bounds = array<i64: 16, 128>}, {transform_indices = @transform_1, window_bounds = array<i64: 16, 128>}, {pipeline_mode = #tpu.pipeline_mode<synchronous>, transform_indices = @transform_2, window_bounds = array<i64: 2, 32>}, {pipeline_mode = #tpu.pipeline_mode<synchronous>, transform_indices = @transform_3, window_bounds = array<i64: 2, 32>}, {transform_indices = @transform_4, window_bounds = array<i64: 1, 1>}, {transform_indices = @transform_5, window_bounds = array<i64: 1, 1>}]} {
    %c0_i32 = arith.constant 0 : i32
    %0 = arith.cmpi eq, %arg0, %c0_i32 : i32
    %1 = arith.extui %0 : i1 to i32
    %c0_i32_0 = arith.constant 0 : i32
    %2 = arith.cmpi ne, %1, %c0_i32_0 : i32
    scf.if %2 {
      %cst = arith.constant 0.000000e+00 : f32
      %13 = vector.broadcast %cst : f32 to vector<16x128xf32>
      %c0_10 = arith.constant 0 : index
      %c0_11 = arith.constant 0 : index
      %14 = vector.load %arg7[%c0_10, %c0_11] : memref<16x128xf32, #tpu.memory_space<vmem>>, vector<16x128xf32>
      tpu.vector_store %arg7[%c0_10, %c0_11], %13 {strides = array<i32>} : memref<16x128xf32, #tpu.memory_space<vmem>>, vector<16x128xf32>,
      %c0_12 = arith.constant 0 : index
      %c0_13 = arith.constant 0 : index
      %15 = vector.load %arg3[%c0_12, %c0_13] : memref<2x32xf32, #tpu.memory_space<vmem>>, vector<2x32xf32>
      %c0_14 = arith.constant 0 : index
      %c0_15 = arith.constant 0 : index
      %16 = vector.load %arg4[%c0_14, %c0_15] : memref<2x32xf32, #tpu.memory_space<vmem>>, vector<2x32xf32>
      %cst_16 = arith.constant 1.000000e+00 : f32
      %17 = vector.broadcast %cst_16 : f32 to vector<2x32xf32>
      %18 = arith.mulf %16, %17 : vector<2x32xf32>
      %19 = arith.mulf %18, %18 : vector<2x32xf32>
      %cst_17 = arith.constant 0.000000e+00 : f32
      %20 = vector.broadcast %cst_17 : f32 to vector<2x32xf32>
      %21 = arith.subf %15, %20 : vector<2x32xf32>
      %cst_18 = arith.constant 1.000000e+00 : f32
      %22 = vector.broadcast %cst_18 : f32 to vector<2x32xf32>
      %23 = arith.mulf %21, %22 : vector<2x32xf32>
      %24 = arith.mulf %23, %23 : vector<2x32xf32>
      %25 = arith.addf %19, %24 : vector<2x32xf32>
      %cst_19 = arith.constant 1.000000e+00 : f32
      %26 = vector.broadcast %cst_19 : f32 to vector<2x32xf32>
      %27 = arith.subf %25, %26 : vector<2x32xf32>
      %28 = math.log %19 : vector<2x32xf32>
      %29 = arith.subf %27, %28 : vector<2x32xf32>
      %cst_20 = arith.constant 5.000000e-01 : f32
      %30 = vector.broadcast %cst_20 : f32 to vector<2x32xf32>
      %31 = arith.mulf %30, %29 : vector<2x32xf32>
      %32 = vector.shape_cast %31 : vector<2x32xf32> to vector<1x2x32xf32>
      %cst_21 = arith.constant dense<0.000000e+00> : vector<1xf32>
      %33 = vector.multi_reduction <add>, %32, %cst_21 [1, 2] : vector<1x2x32xf32> to vector<1xf32>
      %34 = vector.shape_cast %33 : vector<1xf32> to vector<1x1x1xf32>
      %35 = vector.extract %34[0, 0, 0] : f32 from vector<1x1x1xf32>
      %cst_22 = arith.constant 5.000000e-01 : f32
      %36 = arith.mulf %35, %cst_22 : f32
      %c0_23 = arith.constant 0 : index
      %c0_24 = arith.constant 0 : index
      %37 = memref.load %arg5[%c0_23, %c0_24] : memref<1x1xf32, #tpu.memory_space<smem>>
      memref.store %36, %arg5[%c0_23, %c0_24] : memref<1x1xf32, #tpu.memory_space<smem>>
    } else {
    }
    %c0 = arith.constant 0 : index
    %c0_1 = arith.constant 0 : index
    %3 = vector.load %arg1[%c0, %c0_1] : memref<16x128xf32, #tpu.memory_space<vmem>>, vector<16x128xf32>
    %c0_2 = arith.constant 0 : index
    %c0_3 = arith.constant 0 : index
    %4 = vector.load %arg2[%c0_2, %c0_3] : memref<16x128xf32, #tpu.memory_space<vmem>>, vector<16x128xf32>
    %5 = arith.subf %3, %4 : vector<16x128xf32>
    %c0_4 = arith.constant 0 : index
    %c0_5 = arith.constant 0 : index
    %6 = vector.load %arg7[%c0_4, %c0_5] : memref<16x128xf32, #tpu.memory_space<vmem>>, vector<16x128xf32>
    %7 = arith.mulf %5, %5 : vector<16x128xf32>
    %8 = arith.addf %6, %7 : vector<16x128xf32>
    %c0_6 = arith.constant 0 : index
    %c0_7 = arith.constant 0 : index
    %9 = vector.load %arg7[%c0_6, %c0_7] : memref<16x128xf32, #tpu.memory_space<vmem>>, vector<16x128xf32>
    tpu.vector_store %arg7[%c0_6, %c0_7], %8 {strides = array<i32>} : memref<16x128xf32, #tpu.memory_space<vmem>>, vector<16x128xf32>,
    %c0_i32_8 = arith.constant 0 : i32
    %10 = arith.cmpi eq, %arg0, %c0_i32_8 : i32
    %11 = arith.extui %10 : i1 to i32
    %c0_i32_9 = arith.constant 0 : i32
    %12 = arith.cmpi ne, %11, %c0_i32_9 : i32
    scf.if %12 {
      %c0_10 = arith.constant 0 : index
      %c0_11 = arith.constant 0 : index
      %13 = vector.load %arg7[%c0_10, %c0_11] : memref<16x128xf32, #tpu.memory_space<vmem>>, vector<16x128xf32>
      %14 = vector.shape_cast %13 : vector<16x128xf32> to vector<1x16x128xf32>
      %cst = arith.constant dense<0.000000e+00> : vector<1xf32>
      %15 = vector.multi_reduction <add>, %14, %cst [1, 2] : vector<1x16x128xf32> to vector<1xf32>
      %16 = vector.shape_cast %15 : vector<1xf32> to vector<1x1x1xf32>
      %17 = vector.extract %16[0, 0, 0] : f32 from vector<1x1x1xf32>
      %cst_12 = arith.constant 5.000000e-01 : f32
      %18 = arith.mulf %17, %cst_12 : f32
      %c0_13 = arith.constant 0 : index
      %c0_14 = arith.constant 0 : index
      %19 = memref.load %arg6[%c0_13, %c0_14] : memref<1x1xf32, #tpu.memory_space<smem>>
      memref.store %18, %arg6[%c0_13, %c0_14] : memref<1x1xf32, #tpu.memory_space<smem>>
    } else {
    }
    return
  }
  func.func @transform_0(%arg0: i32) -> (i32, i32) {
    %c0_i32 = arith.constant 0 : i32
    %c0_i32_0 = arith.constant 0 : i32
    return %arg0, %c0_i32 : i32, i32
  }
  func.func @transform_1(%arg0: i32) -> (i32, i32) {
    %c0_i32 = arith.constant 0 : i32
    %c0_i32_0 = arith.constant 0 : i32
    return %arg0, %c0_i32 : i32, i32
  }
  func.func @transform_2(%arg0: i32) -> (i32, i32) {
    %c0_i32 = arith.constant 0 : i32
    %c0_i32_0 = arith.constant 0 : i32
    %c0_i32_1 = arith.constant 0 : i32
    return %c0_i32, %c0_i32_0 : i32, i32
  }
  func.func @transform_3(%arg0: i32) -> (i32, i32) {
    %c0_i32 = arith.constant 0 : i32
    %c0_i32_0 = arith.constant 0 : i32
    %c0_i32_1 = arith.constant 0 : i32
    return %c0_i32, %c0_i32_0 : i32, i32
  }
  func.func @transform_4(%arg0: i32) -> (i32, i32) {
    %c0_i32 = arith.constant 0 : i32
    %c0_i32_0 = arith.constant 0 : i32
    %c0_i32_1 = arith.constant 0 : i32
    return %c0_i32, %c0_i32_0 : i32, i32
  }
  func.func @transform_5(%arg0: i32) -> (i32, i32) {
    %c0_i32 = arith.constant 0 : i32
    %c0_i32_0 = arith.constant 0 : i32
    %c0_i32_1 = arith.constant 0 : i32
    return %c0_i32, %c0_i32_0 : i32, i32
  }
}

</mosaic_0001>

<llo_original>
// kernel: tpu_custom_call.1
$region0: #{tpu_custom_call.1}
  #allocation0 [shape = 'u32[]', space=smem, size = 0x4, offset = 0x4, fixed_abs, tag = 'smem constant byte address 0x4 - core index']
  #allocation1 [shape = 'u32[144,128]{1,0:T(1,128)}', space=vmem, size = 0x12000, scoped, tag = 'internal scratch']
  #allocation2 [shape = 'f32[16,128]{1,0:T(8,128)}', space=vmem, size = 0x2000, scoped, tag = 'scratch operand']
  %s0 = inlined_call_operand.hbm [shape: f32[16,128], index: 0, kind: input, shape index: {}]
  %s1 = inlined_call_operand.hbm [shape: f32[16,128], index: 1, kind: input, shape index: {}]
  %s2 = inlined_call_operand.vmem [shape: f32[2,32], index: 2, kind: input, shape index: {}]
  %s3 = inlined_call_operand.vmem [shape: f32[2,32], index: 3, kind: input, shape index: {}]
  %s4 = inlined_call_operand.hbm [shape: f32[1,1], index: 4, kind: output, shape index: {0}]
  %s5 = inlined_call_operand.hbm [shape: f32[1,1], index: 5, kind: output, shape index: {1}]
  %6 = xla_tuple %s4, %s5
  %s7 = sld [smem:[#allocation0]]
  $region50: #{tpu_custom_call.1} parent=0
    _
  %s9 = ssub.s32 1, %s7
  %s10 = scalar_select 0, %s9, %s7
  $region1: #{tpu_custom_call.1} parent=0
    #allocation3 [shape = 'u8[8192]{0}', space=vmem, size = 0x2000, scoped, tag = 'input window, operand 0, single buffered']
    #allocation4 [shape = 's32[1]{0}', space=sflag, size = 0x4, scoped, tag = 'scoped memory for tpu_custom_call.1']
    #allocation5 [shape = 's32[1]{0}', space=sflag, size = 0x4, scoped, tag = 'scoped memory for tpu_custom_call.1']
    #allocation6 [shape = 'u8[8192]{0}', space=vmem, size = 0x2000, scoped, tag = 'input window, operand 1, single buffered']
    #allocation7 [shape = 's32[1]{0}', space=sflag, size = 0x4, scoped, tag = 'scoped memory for tpu_custom_call.1']
    #allocation8 [shape = 'u8[512]{0}', space=smem, size = 0x200, scoped, tag = 'output window, operand 0, single buffered']
    #allocation9 [shape = 'u8[512]{0}', space=smem, size = 0x200, scoped, tag = 'output window, operand 1, single buffered']
    #allocation10 [shape = 's32[1]{0}', space=sflag, size = 0x4, scoped, tag = 'scoped memory for tpu_custom_call.1']
    %11 = vsyncpa [#allocation4], 0
    %12 = vsyncpa [#allocation7], 0
    %13 = vsyncpa [#allocation5], 0
    %14 = vsyncpa [#allocation10], 0
    // Predicated region
    $region2: #{tpu_custom_call.1} parent=1 // pred_check
      _
    $region3: #{tpu_custom_call.1} parent=1 // pred_check_branch
      %16 = sbr.rel (0) target = $region5
    $region4: #{tpu_custom_call.1} parent=1 // pred_region
      %s18 = ssub.s32 256, 256
      %19 = vsyncadd [#allocation4], %s18
      %s20 = sshll.u32 [#allocation3], 4
      %s21 = int_to_ptr.vmem [resolvable:$true] %s20
      %26 = dma.hbm_to_vmem [thread:$0]  %s0, 256, %s21, [#allocation4], 128, 128, 8
    $region5: #{tpu_custom_call.1} parent=1 // pred_fallthru
      _
    // Predicated region
    $region6: #{tpu_custom_call.1} parent=1 // pred_check
      _
    $region7: #{tpu_custom_call.1} parent=1 // pred_check_branch
      %28 = sbr.rel (0) target = $region9
    $region8: #{tpu_custom_call.1} parent=1 // pred_region
      %s30 = ssub.s32 256, 256
      %31 = vsyncadd [#allocation7], %s30
      %s32 = sshll.u32 [#allocation6], 4
      %s33 = int_to_ptr.vmem [resolvable:$true] %s32
      %38 = dma.hbm_to_vmem [thread:$0]  %s1, 256, %s33, [#allocation7], 128, 128, 8
    $region9: #{tpu_custom_call.1} parent=1 // pred_fallthru
      _
    // Predicated region
    $region10: #{tpu_custom_call.1} parent=1 // pred_check
      _
    $region11: #{tpu_custom_call.1} parent=1 // pred_check_branch
      %40 = sbr.rel (0) target = $region13
    $region12: #{tpu_custom_call.1} parent=1 // pred_region
      _
    $region13: #{tpu_custom_call.1} parent=1 // pred_fallthru
      _
    // Predicated region
    $region14: #{tpu_custom_call.1} parent=1 // pred_check
      _
    $region15: #{tpu_custom_call.1} parent=1 // pred_check_branch
      %42 = sbr.rel (0) target = $region17
    $region16: #{tpu_custom_call.1} parent=1 // pred_region
      _
    $region17: #{tpu_custom_call.1} parent=1 // pred_fallthru
      _
    // Predicated region
    $region18: #{tpu_custom_call.1} parent=1 // pred_check
      _
    $region19: #{tpu_custom_call.1} parent=1 // pred_check_branch
      %44 = sbr.rel (0) target = $region21
    $region20: #{tpu_custom_call.1} parent=1 // pred_region
      %45 = dma.done [#allocation4], 256
    $region21: #{tpu_custom_call.1} parent=1 // pred_fallthru
      _
    // Predicated region
    $region22: #{tpu_custom_call.1} parent=1 // pred_check
      _
    $region23: #{tpu_custom_call.1} parent=1 // pred_check_branch
      %47 = sbr.rel (0) target = $region25
    $region24: #{tpu_custom_call.1} parent=1 // pred_region
      %48 = dma.done [#allocation7], 256
    $region25: #{tpu_custom_call.1} parent=1 // pred_fallthru
      _
    %p49 = scmp.eq.s32.totalorder 0, 0
    // Predicated region
    $region26: #{tpu_custom_call.1} parent=1 // pred_check
      %p50 = pneg %p49
    $region27: #{tpu_custom_call.1} parent=1 // pred_check_branch
      %52 = sbr.rel (%p50) target = $region29
    $region28: #{tpu_custom_call.1} parent=1 // pred_region
      %53 = vst [vmem:[#allocation2] sm:$0xff] 0.0
      %54 = vst [vmem:[#allocation2 + $0x8] sm:$0xff] 0.0
      %v55 = vld [vmem:[%s2] sm:$0x3]
      %v56 = vld [vmem:[%s3] sm:$0x3]
      %v57 = vmul.f32 %v56, %v56
      %v58 = vmul.f32 %v55, %v55
      %v59 = vadd.f32 %v57, %v58
      %v60 = vsub.f32 %v59, 1.0
      %v61 = vlog2.pop %v57
      %v62 = vmul.f32 %v61, 0.6931472
      %v63 = vsub.f32 %v60, %v62
      %v64 = vmul.f32 %v63, 0.5
      %vm65 = vcmask 254976
      %v66 = vsel %vm65, %v64, 0.0
      %67 = vadd.xlane.f32.xlu0 %v66
      %v68 = vpop.xlane.xlu0 %67
      %v69 = vrot.slane %v68, 4
      %v70 = vadd.f32 %v68, %v69
      %v71 = vrot.slane %v70, 2
      %v72 = vadd.f32 %v70, %v71
      %v73 = vrot.slane %v72, 1
      %v74 = vadd.f32 %v72, %v73
      %s75 = vtos %v74
      %s76 = smul.f32 %s75, 0.5
      %s77 = scalar_lea.smem [#allocation8], 0
      %78 = sst [smem:[%s77]] %s76
    $region29: #{tpu_custom_call.1} parent=1 // pred_fallthru
      _
    %v79 = vld [vmem:[#allocation3] sm:$0xff]
    %v80 = vld [vmem:[#allocation3 + $0x8] sm:$0xff]
    %v81 = vld [vmem:[#allocation6] sm:$0xff]
    %v82 = vld [vmem:[#allocation6 + $0x8] sm:$0xff]
    %v83 = vsub.f32 %v79, %v81
    %v84 = vsub.f32 %v80, %v82
    %v85 = vld [vmem:[#allocation2] sm:$0xff]
    %v86 = vld [vmem:[#allocation2 + $0x8] sm:$0xff]
    %v87 = vmul.f32 %v83, %v83
    %v88 = vmul.f32 %v84, %v84
    %v89 = vadd.f32 %v85, %v87
    %v90 = vadd.f32 %v86, %v88
    %91 = vst [vmem:[#allocation2] sm:$0xff] %v89
    %92 = vst [vmem:[#allocation2 + $0x8] sm:$0xff] %v90
    // Predicated region
    $region30: #{tpu_custom_call.1} parent=1 // pred_check
      %p93 = pneg %p49
    $region31: #{tpu_custom_call.1} parent=1 // pred_check_branch
      %95 = sbr.rel (%p93) target = $region33
    $region32: #{tpu_custom_call.1} parent=1 // pred_region
      %v96 = vld [vmem:[#allocation2] sm:$0xff]
      %v97 = vld [vmem:[#allocation2 + $0x8] sm:$0xff]
      %v98 = vadd.f32 %v96, %v97
      %99 = vadd.xlane.f32.xlu0 %v98
      %v100 = vpop.xlane.xlu0 %99
      %v101 = vrot.slane %v100, 4
      %v102 = vadd.f32 %v100, %v101
      %v103 = vrot.slane %v102, 2
      %v104 = vadd.f32 %v102, %v103
      %v105 = vrot.slane %v104, 1
      %v106 = vadd.f32 %v104, %v105
      %s107 = vtos %v106
      %s108 = smul.f32 %s107, 0.5
      %s109 = scalar_lea.smem [#allocation9], 0
      %110 = sst [smem:[%s109]] %s108
    $region33: #{tpu_custom_call.1} parent=1 // pred_fallthru
      _
    // Predicated region
    $region34: #{tpu_custom_call.1} parent=1 // pred_check
      _
    $region35: #{tpu_custom_call.1} parent=1 // pred_check_branch
      %112 = sbr.rel (0) target = $region37
    $region36: #{tpu_custom_call.1} parent=1 // pred_region
      %s114 = ssub.s32 16, 16
      %115 = vsyncadd [#allocation5], %s114
      %118 = dma.smem_to_hbm [#allocation8], 16, %s4, [#allocation5]
    $region37: #{tpu_custom_call.1} parent=1 // pred_fallthru
      _
    // Predicated region
    $region38: #{tpu_custom_call.1} parent=1 // pred_check
      _
    $region39: #{tpu_custom_call.1} parent=1 // pred_check_branch
      %120 = sbr.rel (0) target = $region41
    $region40: #{tpu_custom_call.1} parent=1 // pred_region
      %s122 = ssub.s32 16, 16
      %123 = vsyncadd [#allocation10], %s122
      %126 = dma.smem_to_hbm [#allocation9], 16, %s5, [#allocation10]
    $region41: #{tpu_custom_call.1} parent=1 // pred_fallthru
      _
    // Predicated region
    $region42: #{tpu_custom_call.1} parent=1 // pred_check
      _
    $region43: #{tpu_custom_call.1} parent=1 // pred_check_branch
      %128 = sbr.rel (0) target = $region45
    $region44: #{tpu_custom_call.1} parent=1 // pred_region
      %129 = dma.done [#allocation5], 16
    $region45: #{tpu_custom_call.1} parent=1 // pred_fallthru
      _
    // Predicated region
    $region46: #{tpu_custom_call.1} parent=1 // pred_check
      _
    $region47: #{tpu_custom_call.1} parent=1 // pred_check_branch
      %131 = sbr.rel (0) target = $region49
    $region48: #{tpu_custom_call.1} parent=1 // pred_region
      %132 = dma.done [#allocation10], 16
    $region49: #{tpu_custom_call.1} parent=1 // pred_fallthru
      _
    %133 = sfence
    %134 = vsyncpa [#allocation4], 1
    %135 = vsyncpa [#allocation7], 1
    %136 = vsyncpa [#allocation5], 1
    %137 = vsyncpa [#allocation10], 1

</llo_original>
